<compile_context>
chip_gen: v7x
topology: tpu7x:2x2x1
jax: 0.10.0
libtpu: 0.0.40
codegen_flags: <defaults>
</compile_context>

<pallas_src>
import functools

import jax
import jax.numpy as jnp
from jax import lax
from jax.experimental import pallas as pl
from jax.experimental.pallas import tpu as pltpu

_VMEM_LIMIT = 48 * 1024 * 1024  # above defaults, below v7x physical 64 MiB


# ----------------------------- tiled linear -------------------------------- #

def _linear_kernel(x_ref, w_ref, b_ref, o_ref, acc_ref):
    @pl.when(pl.program_id(2) == 0)
    def _init():
        acc_ref[...] = jnp.zeros_like(acc_ref)

    # bf16 MXU inputs, f32 accumulation (casts are no-ops if already bf16).
    acc_ref[...] += jnp.dot(x_ref[...].astype(jnp.bfloat16),
                            w_ref[...].astype(jnp.bfloat16),
                            preferred_element_type=jnp.float32)

    @pl.when(pl.program_id(2) == pl.num_programs(2) - 1)
    def _store():
        o_ref[...] = (acc_ref[...] + b_ref[...]).astype(o_ref.dtype)


def _round_up(v, m):
    return ((v + m - 1) // m) * m


def _pick_tile(dim, pref, align):
    """Largest tile <= pref that is a multiple of `align` and divides `dim`;
    falls back to the full dimension (full-extent blocks are always legal)."""
    if dim <= pref:
        return dim
    if dim % align != 0:
        return dim
    t = (pref // align) * align
    while t >= align:
        if dim % t == 0:
            return t
        t -= align
    return dim


def pallas_linear(x2d, w, b, *, out_dtype=jnp.float32, tm=512, tn=512, tk=512):
    """(M, K) @ (K, Nout) + (Nout,) -> (M, Nout), tiled + pipelined.

    The row dimension M is padded to a multiple of the row tile so awkward
    M = B_*N never falls back to a single full-extent (M, K) VMEM block."""
    M, K = x2d.shape
    Kw, Nout = w.shape
    assert K == Kw
    tm = min(tm, _round_up(M, 8))
    Mp = _round_up(M, tm)
    tn = _pick_tile(Nout, tn, 128)
    tk = _pick_tile(K, tk, 128)
    xp = x2d if Mp == M else jnp.pad(x2d, ((0, Mp - M), (0, 0)))
    grid = (Mp // tm, Nout // tn, K // tk)
    out = pl.pallas_call(
        _linear_kernel,
        out_shape=jax.ShapeDtypeStruct((Mp, Nout), out_dtype),
        grid_spec=pltpu.PrefetchScalarGridSpec(
            num_scalar_prefetch=0,
            grid=grid,
            in_specs=[
                pl.BlockSpec((tm, tk), lambda i, j, kk: (i, kk)),
                pl.BlockSpec((tk, tn), lambda i, j, kk: (kk, j)),
                pl.BlockSpec((1, tn), lambda i, j, kk: (0, j)),
            ],
            out_specs=pl.BlockSpec((tm, tn), lambda i, j, kk: (i, j)),
            scratch_shapes=[pltpu.VMEM((tm, tn), jnp.float32)],
        ),
        compiler_params=pltpu.CompilerParams(
            dimension_semantics=("parallel", "parallel", "arbitrary"),
            vmem_limit_bytes=_VMEM_LIMIT),
    )(xp, w, b.reshape(1, Nout))
    return out if Mp == M else out[:M]


# --------------------------- attention core --------------------------------- #

def _attn_kernel(*refs, num_heads, head_dim, has_mask):
    # refs (masked):   qkv_ref, bias_ref, mask_ref, o_ref, acc_ref
    # refs (unmasked): qkv_ref, bias_ref,           o_ref, acc_ref
    # qkv_ref : (N, 3C) bf16  -- columns laid out as [3, num_heads, head_dim]
    # bias_ref: (num_heads, N, N) f32   (dynamic position bias, shared over batch)
    # mask_ref: (N, N) f32              (per-group additive mask)
    # o_ref   : (N, C) bf16             (head-major [num_heads, head_dim] cols)
    # acc_ref : (N, C) f32 VMEM scratch (per-head results, released each iter)
    if has_mask:
        qkv_ref, bias_ref, mask_ref, o_ref, acc_ref = refs
    else:
        qkv_ref, bias_ref, o_ref, acc_ref = refs
        mask_ref = None

    C = num_heads * head_dim
    x = qkv_ref[...]
    if has_mask:
        m = mask_ref[...]

    for hh in range(num_heads):            # static unroll over heads
        lo = hh * head_dim
        q_h = x[:, lo:lo + head_dim].astype(jnp.bfloat16)            # scale pre-folded
        k_h = x[:, C + lo:C + lo + head_dim].astype(jnp.bfloat16)
        v_h = x[:, 2 * C + lo:2 * C + lo + head_dim].astype(jnp.bfloat16)
        # q @ k^T without an explicit transpose: contract head_dim of both.
        s = lax.dot_general(q_h, k_h, (((1,), (1,)), ((), ())),
                            preferred_element_type=jnp.float32)      # (N, N) f32
        s = s + bias_ref[hh]
        if has_mask:
            s = s + m
        # softmax in f32 (native VPU/EUP path on all generations)
        s = s - jnp.max(s, axis=-1, keepdims=True)
        p = jnp.exp(s)
        p = p * pl.reciprocal(jnp.sum(p, axis=-1, keepdims=True), approx=True)
        acc_ref[:, lo:lo + head_dim] = jnp.dot(p.astype(jnp.bfloat16), v_h,
                                               preferred_element_type=jnp.float32)
    o_ref[...] = acc_ref[...].astype(o_ref.dtype)     # one lane-dense store over C


def pallas_attention_core(qkv, pos_bias, mask_arr, *, num_heads, head_dim):
    """qkv: (B_, N, 3C) bf16; pos_bias: (h, N, N) f32; mask_arr: (nP, N, N) f32 or
    None -> (B_, N, C) bf16."""
    B_, N, threeC = qkv.shape
    C = num_heads * head_dim
    assert threeC == 3 * C
    has_mask = mask_arr is not None

    kernel = functools.partial(_attn_kernel, num_heads=num_heads,
                               head_dim=head_dim, has_mask=has_mask)
    in_specs = [
        pl.BlockSpec((None, N, threeC), lambda b: (b, 0, 0)),
        pl.BlockSpec((num_heads, N, N), lambda b: (0, 0, 0)),
    ]
    args = [qkv, pos_bias]
    if has_mask:
        nP = mask_arr.shape[0]
        in_specs.append(pl.BlockSpec((None, N, N), lambda b: (b % nP, 0, 0)))
        args.append(mask_arr)

    return pl.pallas_call(
        kernel,
        out_shape=jax.ShapeDtypeStruct((B_, N, C), jnp.bfloat16),
        grid=(B_,),
        in_specs=in_specs,
        out_specs=pl.BlockSpec((None, N, C), lambda b: (b, 0, 0)),
        scratch_shapes=[pltpu.VMEM((N, C), jnp.float32)],
        compiler_params=pltpu.CompilerParams(
            dimension_semantics=("parallel",),
            vmem_limit_bytes=_VMEM_LIMIT),
    )(*args)


# -------------------------- DynamicPosBias (glue) --------------------------- #

def _layernorm(x, g, b, eps=1e-5):
    mu = jnp.mean(x, axis=-1, keepdims=True)
    var = jnp.mean((x - mu) ** 2, axis=-1, keepdims=True)
    return (x - mu) * jax.lax.rsqrt(var + eps) * g + b


def dynamic_pos_bias(params, H, W, num_heads):
    # relative-offset grid ((2H-1)*(2W-1), 2) -> tiny MLP -> gather -> (h, N, N)
    pbh = jnp.arange(1 - H, H)
    pbw = jnp.arange(1 - W, W)
    biases = jnp.stack(jnp.meshgrid(pbh, pbw, indexing="ij"))
    biases = biases.reshape(2, -1).T.astype(jnp.float32)

    coords = jnp.stack(jnp.meshgrid(jnp.arange(H), jnp.arange(W), indexing="ij"))
    cf = coords.reshape(2, -1)
    rel = (cf[:, :, None] - cf[:, None, :]).transpose(1, 2, 0)
    rel = rel.at[:, :, 0].add(H - 1)
    rel = rel.at[:, :, 1].add(W - 1)
    rel = rel.at[:, :, 0].multiply(2 * W - 1)
    rpi = rel.sum(-1)

    p = params
    x = biases @ p["pos_proj_w"] + p["pos_proj_b"]
    x = _layernorm(x, p["ln1_g"], p["ln1_b"])
    x = jax.nn.relu(x)
    x = x @ p["pos1_w"] + p["pos1_b"]
    x = _layernorm(x, p["ln2_g"], p["ln2_b"])
    x = jax.nn.relu(x)
    x = x @ p["pos2_w"] + p["pos2_b"]
    x = _layernorm(x, p["ln3_g"], p["ln3_b"])
    x = jax.nn.relu(x)
    x = x @ p["pos3_w"] + p["pos3_b"]            # ((2H-1)(2W-1), num_heads)

    N = H * W
    rpb = x[rpi.reshape(-1)].reshape(N, N, num_heads).transpose(2, 0, 1)
    return rpb.astype(jnp.float32)               # (h, N, N)


# ---------------------------- Param preparation ----------------------------- #

def fold_qkv_scale(params, *, dim, scale):
    """Done ONCE at setup: fold the qk scale into the q-columns of the qkv
    projection and pre-cast matmul weights to bf16 (MXU input dtype)."""
    scale_vec = jnp.concatenate([jnp.full((dim,), scale, jnp.float32),
                                 jnp.ones((2 * dim,), jnp.float32)])
    p = dict(params)
    p["qkv_w_folded"] = (params["qkv_w"] * scale_vec[None, :]).astype(jnp.bfloat16)
    p["qkv_b_folded"] = params["qkv_b"] * scale_vec
    p["proj_w_bf16"] = params["proj_w"].astype(jnp.bfloat16)
    return p


# ------------------------------ Full forward -------------------------------- #

def attention_forward(params, x, H, W, mask=None, *, num_heads, scale,
                      position_bias=True):
    B_, N, C = x.shape
    assert H * W == N
    hd = C // num_heads

    if "qkv_w_folded" in params:
        qkv_w, qkv_b = params["qkv_w_folded"], params["qkv_b_folded"]
        proj_w = params["proj_w_bf16"]
    else:  # fallback: fold on the fly
        scale_vec = jnp.concatenate([jnp.full((C,), scale, jnp.float32),
                                     jnp.ones((2 * C,), jnp.float32)])
        qkv_w = (params["qkv_w"] * scale_vec[None, :]).astype(jnp.bfloat16)
        qkv_b = params["qkv_b"] * scale_vec
        proj_w = params["proj_w"].astype(jnp.bfloat16)

    # QKV projection (tiled Pallas matmul), emitted bf16, kept fused as (B_, N, 3C).
    qkv = pallas_linear(x.reshape(B_ * N, C), qkv_w, qkv_b,
                        out_dtype=jnp.bfloat16).reshape(B_, N, 3 * C)

    # Unbroadcast additive biases (shared over batch).
    if position_bias:
        pos_bias = dynamic_pos_bias(params, H, W, num_heads)        # (h, N, N)
    else:
        pos_bias = jnp.zeros((num_heads, N, N), jnp.float32)

    mask_arr = None
    if mask is not None:
        mask_arr = jnp.asarray(mask, jnp.float32)                   # (nP, N, N)
        assert B_ % mask_arr.shape[0] == 0

    # Attention core (Pallas): all heads per batch, direct (B_, N, C) bf16 output.
    out = pallas_attention_core(qkv, pos_bias, mask_arr,
                                num_heads=num_heads, head_dim=hd)

    # Output projection (tiled Pallas matmul), final output back to f32.
    out = pallas_linear(out.reshape(B_ * N, C), proj_w, params["proj_b"],
                        out_dtype=jnp.float32)
    return out.reshape(B_, N, C)


# ------------------------------- Reference ---------------------------------- #

def reference_forward(params, x, H, W, mask=None, *, num_heads, scale,
                      position_bias=True):
    B_, N, C = x.shape
    hd = C // num_heads
    qkv = (x.reshape(-1, C) @ params["qkv_w"] + params["qkv_b"])
    qkv = qkv.reshape(B_, N, 3, num_heads, hd).transpose(2, 0, 3, 1, 4)
    q, k, v = qkv[0] * scale, qkv[1], qkv[2]
    attn = jnp.einsum("bhnd,bhmd->bhnm", q, k)
    if position_bias:
        attn = attn + dynamic_pos_bias(params, H, W, num_heads)[None]
    if mask is not None:
        nP = mask.shape[0]
        attn = attn.reshape(B_ // nP, nP, num_heads, N, N) + mask[None, :, None]
        attn = attn.reshape(B_, num_heads, N, N)
    attn = jax.nn.softmax(attn, axis=-1)
    out = jnp.einsum("bhnm,bhmd->bhnd", attn, v).transpose(0, 2, 1, 3).reshape(B_, N, C)
    out = (out.reshape(-1, C) @ params["proj_w"] + params["proj_b"]).reshape(B_, N, C)
    return out


# ------------------------------- Param init --------------------------------- #

def init_params(key, dim, num_heads):
    pos_dim = (dim // 4) // 4      # DynamicPosBias(dim//4, h) -> pos_dim = (dim//4)//4
    ks = jax.random.split(key, 12)

    def w(k, shp, s=0.05):
        return s * jax.random.normal(k, shp, jnp.float32)

    return dict(
        qkv_w=w(ks[0], (dim, 3 * dim)), qkv_b=w(ks[1], (3 * dim,)),
        proj_w=w(ks[2], (dim, dim)), proj_b=w(ks[3], (dim,)),
        pos_proj_w=w(ks[4], (2, pos_dim)), pos_proj_b=w(ks[5], (pos_dim,)),
        ln1_g=jnp.ones((pos_dim,), jnp.float32), ln1_b=jnp.zeros((pos_dim,), jnp.float32),
        pos1_w=w(ks[6], (pos_dim, pos_dim)), pos1_b=w(ks[7], (pos_dim,)),
        ln2_g=jnp.ones((pos_dim,), jnp.float32), ln2_b=jnp.zeros((pos_dim,), jnp.float32),
        pos2_w=w(ks[8], (pos_dim, pos_dim)), pos2_b=w(ks[9], (pos_dim,)),
        ln3_g=jnp.ones((pos_dim,), jnp.float32), ln3_b=jnp.zeros((pos_dim,), jnp.float32),
        pos3_w=w(ks[10], (pos_dim, num_heads)), pos3_b=w(ks[11], (num_heads,)),
    )


# ---------------------------------- Main ------------------------------------ #

if __name__ == "__main__":
    dim, num_heads = 32, 4
    B_, H, W = 2, 4, 4               # B_ = num_groups * batch, N = H*W = 16
    N = H * W
    head_dim = dim // num_heads
    scale = head_dim ** (-0.5)

    key = jax.random.PRNGKey(0)
    kp, kx, km = jax.random.split(key, 3)
    params = init_params(kp, dim, num_heads)
    run_params = fold_qkv_scale(params, dim=dim, scale=scale)   # fold scale once
    x = jax.random.normal(kx, (B_, N, dim), jnp.float32)

    # --- no-mask path ---
    out = attention_forward(run_params, x, H, W, mask=None,
                            num_heads=num_heads, scale=scale)
    jax.block_until_ready(out)
    ref = reference_forward(params, x, H, W, mask=None,
                            num_heads=num_heads, scale=scale)
    assert out.shape == (B_, N, dim)
    # bf16 MXU inputs / bf16 intermediate handoffs -> slightly looser tolerance.
    assert jnp.allclose(out, ref, atol=2e-2, rtol=2e-2), "no-mask path mismatch"

    # --- masked path: mask (nP, N, N) of 0 / -inf-ish ---
    nP = B_
    mask = jnp.where(jax.random.bernoulli(km, 0.2, (nP, N, N)), -100.0, 0.0)
    out_m = attention_forward(run_params, x, H, W, mask=mask,
                              num_heads=num_heads, scale=scale)
    jax.block_until_ready(out_m)
    ref_m = reference_forward(params, x, H, W, mask=mask,
                              num_heads=num_heads, scale=scale)
    assert jnp.allclose(out_m, ref_m, atol=2e-2, rtol=2e-2), "masked path mismatch"

    print("KERNEL_OK")
</pallas_src>

<mosaic_0001>
module attributes {stable_mosaic.version = 11 : i64} {
  func.func @_linear_kernel(%arg0: i32, %arg1: i32, %arg2: i32, %arg3: memref<32x32xf32, #tpu.memory_space<vmem>>, %arg4: memref<32x96xbf16, #tpu.memory_space<vmem>>, %arg5: memref<1x96xf32, #tpu.memory_space<vmem>>, %arg6: memref<32x96xbf16, #tpu.memory_space<vmem>>, %arg7: memref<32x96xf32, #tpu.memory_space<vmem>>) attributes {dimension_semantics = [#tpu.dimension_semantics<parallel>, #tpu.dimension_semantics<parallel>, #tpu.dimension_semantics<arbitrary>], iteration_bounds = array<i64: 1, 1, 1>, scalar_prefetch = 0 : i64, scratch_operands = 1 : i64, tpu.core_type = #tpu.core_type<tc>, window_params = [{transform_indices = @transform_0, window_bounds = array<i64: 32, 32>}, {transform_indices = @transform_1, window_bounds = array<i64: 32, 96>}, {transform_indices = @transform_2, window_bounds = array<i64: 1, 96>}, {transform_indices = @transform_3, window_bounds = array<i64: 32, 96>}]} {
    %c0_i32 = arith.constant 0 : i32
    %0 = arith.cmpi eq, %arg2, %c0_i32 : i32
    %1 = arith.extui %0 : i1 to i32
    %c0_i32_0 = arith.constant 0 : i32
    %2 = arith.cmpi ne, %1, %c0_i32_0 : i32
    scf.if %2 {
      %cst_10 = arith.constant 0.000000e+00 : f32
      %13 = vector.broadcast %cst_10 : f32 to vector<32x96xf32>
      %c0_11 = arith.constant 0 : index
      %c0_12 = arith.constant 0 : index
      %14 = vector.load %arg7[%c0_11, %c0_12] : memref<32x96xf32, #tpu.memory_space<vmem>>, vector<32x96xf32>
      tpu.vector_store %arg7[%c0_11, %c0_12], %13 {strides = array<i32>} : memref<32x96xf32, #tpu.memory_space<vmem>>, vector<32x96xf32>,
    } else {
    }
    %c0 = arith.constant 0 : index
    %c0_1 = arith.constant 0 : index
    %3 = vector.load %arg7[%c0, %c0_1] : memref<32x96xf32, #tpu.memory_space<vmem>>, vector<32x96xf32>
    %c0_2 = arith.constant 0 : index
    %c0_3 = arith.constant 0 : index
    %4 = vector.load %arg3[%c0_2, %c0_3] : memref<32x32xf32, #tpu.memory_space<vmem>>, vector<32x32xf32>
    %5 = arith.truncf %4 : vector<32x32xf32> to vector<32x32xbf16>
    %c0_4 = arith.constant 0 : index
    %c0_5 = arith.constant 0 : index
    %6 = vector.load %arg4[%c0_4, %c0_5] : memref<32x96xbf16, #tpu.memory_space<vmem>>, vector<32x96xbf16>
    %cst = arith.constant dense<0.000000e+00> : vector<32x96xf32>
    %7 = tpu.matmul %5, %6, %cst {dimension_numbers = #tpu.dot_dimension_numbers<[1], [0], [0], [1], [0, 0, 1, 1], [], []>} : vector<32x32xbf16>, vector<32x96xbf16>, vector<32x96xf32> -> vector<32x96xf32>
    %8 = arith.addf %3, %7 : vector<32x96xf32>
    %c0_6 = arith.constant 0 : index
    %c0_7 = arith.constant 0 : index
    %9 = vector.load %arg7[%c0_6, %c0_7] : memref<32x96xf32, #tpu.memory_space<vmem>>, vector<32x96xf32>
    tpu.vector_store %arg7[%c0_6, %c0_7], %8 {strides = array<i32>} : memref<32x96xf32, #tpu.memory_space<vmem>>, vector<32x96xf32>,
    %c0_i32_8 = arith.constant 0 : i32
    %10 = arith.cmpi eq, %arg2, %c0_i32_8 : i32
    %11 = arith.extui %10 : i1 to i32
    %c0_i32_9 = arith.constant 0 : i32
    %12 = arith.cmpi ne, %11, %c0_i32_9 : i32
    scf.if %12 {
      %c0_10 = arith.constant 0 : index
      %c0_11 = arith.constant 0 : index
      %13 = vector.load %arg7[%c0_10, %c0_11] : memref<32x96xf32, #tpu.memory_space<vmem>>, vector<32x96xf32>
      %c0_12 = arith.constant 0 : index
      %c0_13 = arith.constant 0 : index
      %14 = vector.load %arg5[%c0_12, %c0_13] : memref<1x96xf32, #tpu.memory_space<vmem>>, vector<1x96xf32>
      %15 = vector.broadcast %14 : vector<1x96xf32> to vector<32x96xf32>
      %16 = arith.addf %13, %15 : vector<32x96xf32>
      %17 = arith.truncf %16 : vector<32x96xf32> to vector<32x96xbf16>
      %c0_14 = arith.constant 0 : index
      %c0_15 = arith.constant 0 : index
      %18 = vector.load %arg6[%c0_14, %c0_15] : memref<32x96xbf16, #tpu.memory_space<vmem>>, vector<32x96xbf16>
      tpu.vector_store %arg6[%c0_14, %c0_15], %17 {strides = array<i32>} : memref<32x96xbf16, #tpu.memory_space<vmem>>, vector<32x96xbf16>,
    } else {
    }
    return
  }
  func.func @transform_0(%arg0: i32, %arg1: i32, %arg2: i32) -> (i32, i32) {
    %c0_i32 = arith.constant 0 : i32
    return %arg0, %arg2 : i32, i32
  }
  func.func @transform_1(%arg0: i32, %arg1: i32, %arg2: i32) -> (i32, i32) {
    %c0_i32 = arith.constant 0 : i32
    return %arg2, %arg1 : i32, i32
  }
  func.func @transform_2(%arg0: i32, %arg1: i32, %arg2: i32) -> (i32, i32) {
    %c0_i32 = arith.constant 0 : i32
    %c0_i32_0 = arith.constant 0 : i32
    return %c0_i32, %arg1 : i32, i32
  }
  func.func @transform_3(%arg0: i32, %arg1: i32, %arg2: i32) -> (i32, i32) {
    %c0_i32 = arith.constant 0 : i32
    return %arg0, %arg1 : i32, i32
  }
}

</mosaic_0001>

<llo_original>
// kernel: tpu_custom_call.1
$region0: #{tpu_custom_call.1}
  #allocation0 [shape = 'u32[]', space=smem, size = 0x4, offset = 0x4, fixed_abs, tag = 'smem constant byte address 0x4 - core index']
  #allocation1 [shape = 'u32[144,128]{1,0:T(1,128)}', space=vmem, size = 0x12000, scoped, tag = 'internal scratch']
  #allocation2 [shape = 'f32[32,96]{1,0:T(8,128)}', space=vmem, size = 0x4000, scoped, tag = 'scratch operand']
  %s0 = inlined_call_operand.hbm [shape: f32[32,32], index: 0, kind: input, shape index: {}]
  %s1 = inlined_call_operand.hbm [shape: bf16[32,96], index: 1, kind: input, shape index: {}]
  %s2 = inlined_call_operand.vmem [shape: f32[1,96], index: 2, kind: input, shape index: {}]
  %s3 = inlined_call_operand.hbm [shape: bf16[32,96], index: 3, kind: output, shape index: {}]
  %s4 = sld [smem:[#allocation0]]
  $region38: #{tpu_custom_call.1} parent=0
    _
  %s6 = ssub.s32 1, %s4
  %s7 = scalar_select 0, %s6, %s4
  $region1: #{tpu_custom_call.1} parent=0
    #allocation3 [shape = 'u8[16384]{0}', space=vmem, size = 0x4000, scoped, tag = 'input window, operand 0, single buffered']
    #allocation4 [shape = 's32[1]{0}', space=sflag, size = 0x4, scoped, tag = 'scoped memory for tpu_custom_call.1']
    #allocation5 [shape = 's32[1]{0}', space=sflag, size = 0x4, scoped, tag = 'scoped memory for tpu_custom_call.1']
    #allocation6 [shape = 'u8[8192]{0}', space=vmem, size = 0x2000, scoped, tag = 'input window, operand 1, single buffered']
    #allocation7 [shape = 's32[1]{0}', space=sflag, size = 0x4, scoped, tag = 'scoped memory for tpu_custom_call.1']
    #allocation8 [shape = 'u8[8192]{0}', space=vmem, size = 0x2000, scoped, tag = 'output window, operand 0, single buffered']
    %8 = vsyncpa [#allocation4], 0
    %9 = vsyncpa [#allocation7], 0
    %10 = vsyncpa [#allocation5], 0
    // Predicated region
    $region2: #{tpu_custom_call.1} parent=1 // pred_check
      _
    $region3: #{tpu_custom_call.1} parent=1 // pred_check_branch
      %12 = sbr.rel (0) target = $region5
    $region4: #{tpu_custom_call.1} parent=1 // pred_region
      %s14 = ssub.s32 512, 512
      %15 = vsyncadd [#allocation4], %s14
      %s16 = sshll.u32 [#allocation3], 4
      %s17 = int_to_ptr.vmem [resolvable:$true] %s16
      %22 = dma.hbm_to_vmem [thread:$0]  %s0, 512, %s17, [#allocation4], 128, 128, 8
    $region5: #{tpu_custom_call.1} parent=1 // pred_fallthru
      _
    // Predicated region
    $region6: #{tpu_custom_call.1} parent=1 // pred_check
      _
    $region7: #{tpu_custom_call.1} parent=1 // pred_check_branch
      %24 = sbr.rel (0) target = $region9
    $region8: #{tpu_custom_call.1} parent=1 // pred_region
      %s26 = ssub.s32 256, 256
      %27 = vsyncadd [#allocation7], %s26
      %s28 = sshll.u32 [#allocation6], 4
      %s29 = int_to_ptr.vmem [resolvable:$true] %s28
      %34 = dma.hbm_to_vmem [thread:$0]  %s1, 256, %s29, [#allocation7], 64, 64, 4
    $region9: #{tpu_custom_call.1} parent=1 // pred_fallthru
      _
    // Predicated region
    $region10: #{tpu_custom_call.1} parent=1 // pred_check
      _
    $region11: #{tpu_custom_call.1} parent=1 // pred_check_branch
      %36 = sbr.rel (0) target = $region13
    $region12: #{tpu_custom_call.1} parent=1 // pred_region
      _
    $region13: #{tpu_custom_call.1} parent=1 // pred_fallthru
      _
    // Predicated region
    $region14: #{tpu_custom_call.1} parent=1 // pred_check
      _
    $region15: #{tpu_custom_call.1} parent=1 // pred_check_branch
      %38 = sbr.rel (0) target = $region17
    $region16: #{tpu_custom_call.1} parent=1 // pred_region
      %39 = dma.done [#allocation4], 512
    $region17: #{tpu_custom_call.1} parent=1 // pred_fallthru
      _
    // Predicated region
    $region18: #{tpu_custom_call.1} parent=1 // pred_check
      _
    $region19: #{tpu_custom_call.1} parent=1 // pred_check_branch
      %41 = sbr.rel (0) target = $region21
    $region20: #{tpu_custom_call.1} parent=1 // pred_region
      %42 = dma.done [#allocation7], 256
    $region21: #{tpu_custom_call.1} parent=1 // pred_fallthru
      _
    %p44 = scmp.eq.s32.totalorder 0, 0
    // Predicated region
    $region22: #{tpu_custom_call.1} parent=1 // pred_check
      %p45 = pneg %p44
    $region23: #{tpu_custom_call.1} parent=1 // pred_check_branch
      %47 = sbr.rel (%p45) target = $region25
    $region24: #{tpu_custom_call.1} parent=1 // pred_region
      %vm48 = vcmask 785408
      %49 = vst.msk [vmem:[#allocation2] sm:$0xff] %vm48, 0.0
      %50 = vst.msk [vmem:[#allocation2 + $0x8] sm:$0xff] %vm48, 0.0
      %51 = vst.msk [vmem:[#allocation2 + $0x10] sm:$0xff] %vm48, 0.0
      %52 = vst.msk [vmem:[#allocation2 + $0x18] sm:$0xff] %vm48, 0.0
    $region25: #{tpu_custom_call.1} parent=1 // pred_fallthru
      _
    %v53 = vld [vmem:[#allocation2] sm:$0xff]
    %v54 = vld [vmem:[#allocation2 + $0x8] sm:$0xff]
    %v55 = vld [vmem:[#allocation2 + $0x10] sm:$0xff]
    %v56 = vld [vmem:[#allocation2 + $0x18] sm:$0xff]
    %v57 = vld [vmem:[#allocation3] sm:$0xff]
    %v58 = vld [vmem:[#allocation3 + $0x8] sm:$0xff]
    %v59 = vld [vmem:[#allocation3 + $0x10] sm:$0xff]
    %v60 = vld [vmem:[#allocation3 + $0x18] sm:$0xff]
    %v61 = vpack.c.bf16 %v58, %v57
    %v62 = vpack.c.bf16 %v60, %v59
    %v63 = vld [vmem:[#allocation6] sm:$0xf]
    %v64 = vld [vmem:[#allocation6 + $0x4] sm:$0xf]
    %v65 = vld [vmem:[#allocation6 + $0x8] sm:$0xf]
    %v66 = vld [vmem:[#allocation6 + $0xc] sm:$0xf]
    %v71 = vunpack.c.l.b16 %v63
    %v72 = vunpack.c.l.b16 %v64
    %v73 = vunpack.c.l.b16 %v65
    %v74 = vunpack.c.l.b16 %v66
    %v75 = vpack.c.b16 %v72, %v71
    %v76 = vpack.c.b16 %v74, %v73
    %vm79 = vcmask 261120
    %v81 = vsel %vm79, %v61, 0
    %v84 = vsel %vm79, %v62, 0
    %86 = vmatprep.subr.bf16.mxu0 0
    %87 = vmatpush1.bf16.msra.mxu0 %v75
    %88 = vmatprep.subr.bf16.mxu0 0
    %89 = vmatpush1.bf16.msra.mxu0 %v76
    %90 = vmatprep.subr.bf16.mxu0 0
    %91 = vmatpush1.bf16.msra.mxu0 0
    %92 = vmatprep.subr.bf16.mxu0 0
    %93 = vmatpush1.bf16.msra.mxu0 0
    %94 = vmatprep.subr.bf16.mxu0 0
    %95 = vmatpush1.bf16.msra.mxu0 0
    %96 = vmatprep.subr.bf16.mxu0 0
    %97 = vmatpush1.bf16.msra.mxu0 0
    %98 = vmatprep.subr.bf16.mxu0 0
    %99 = vmatpush1.bf16.msra.mxu0 0
    %100 = vmatprep.subr.bf16.mxu0 0
    %101 = vmatpush1.bf16.msra.mxu0 0
    %102 = vmatprep.subr.bf16.mxu0 0
    %103 = vmatpush1.bf16.msra.mxu0 0
    %104 = vmatprep.subr.bf16.mxu0 0
    %105 = vmatpush1.bf16.msra.mxu0 0
    %106 = vmatprep.subr.bf16.mxu0 0
    %107 = vmatpush1.bf16.msra.mxu0 0
    %108 = vmatprep.subr.bf16.mxu0 0
    %109 = vmatpush1.bf16.msra.mxu0 0
    %110 = vmatprep.subr.bf16.mxu0 0
    %111 = vmatpush1.bf16.msra.mxu0 0
    %112 = vmatprep.subr.bf16.mxu0 0
    %113 = vmatpush1.bf16.msra.mxu0 0
    %114 = vmatprep.subr.bf16.mxu0 0
    %115 = vmatpush1.bf16.msra.mxu0 0
    %116 = vmatprep.subr.bf16.mxu0 0
    %117 = vmatpush1.bf16.msra.mxu0 0
    %118 = vmatprep.mubr.bf16.mxu0 0
    %119 = vmatmul.mubr.bf16.gmra.mrb[0].mxu0 %v81
    %v120 = vpop.f32.mrb[0].mxu0
    %v121 = vadd.f32 0.0, %v120
    %v122 = vpop.f32.mrb[0].mxu0
    %v123 = vpop.f32.mrb[0].mxu0
    %v124 = vadd.f32 0.0, %v123
    %v125 = vpop.f32.mrb[0].mxu0
    %126 = vmatprep.mubr.bf16.mxu0 0
    %127 = vmatmul.mubr.bf16.gmra.mrb[0].mxu0 %v84
    %v128 = vpop.f32.mrb[0].mxu0
    %v129 = vadd.f32 0.0, %v128
    %v130 = vpop.f32.mrb[0].mxu0
    %v131 = vpop.f32.mrb[0].mxu0
    %v132 = vadd.f32 0.0, %v131
    %v133 = vpop.f32.mrb[0].mxu0
    %134 = vdwg.mxu0
    %v135 = vadd.f32 %v53, %v121
    %v136 = vadd.f32 %v54, %v124
    %v137 = vadd.f32 %v55, %v129
    %v138 = vadd.f32 %v56, %v132
    %vm139 = vcmask 785408
    %140 = vst.msk [vmem:[#allocation2] sm:$0xff] %vm139, %v135
    %141 = vst.msk [vmem:[#allocation2 + $0x8] sm:$0xff] %vm139, %v136
    %142 = vst.msk [vmem:[#allocation2 + $0x10] sm:$0xff] %vm139, %v137
    %143 = vst.msk [vmem:[#allocation2 + $0x18] sm:$0xff] %vm139, %v138
    // Predicated region
    $region26: #{tpu_custom_call.1} parent=1 // pred_check
      %p144 = pneg %p44
    $region27: #{tpu_custom_call.1} parent=1 // pred_check_branch
      %146 = sbr.rel (%p144) target = $region29
    $region28: #{tpu_custom_call.1} parent=1 // pred_region
      %v147 = vld [vmem:[#allocation2] sm:$0xff]
      %v148 = vld [vmem:[#allocation2 + $0x8] sm:$0xff]
      %v149 = vld [vmem:[#allocation2 + $0x10] sm:$0xff]
      %v150 = vld [vmem:[#allocation2 + $0x18] sm:$0xff]
      %v151 = vld [vmem:[%s2] sm:$0x1]
      %v153 = vlaneseq
      %v154 = vshrl.u32 %v153, 7
      %v155 = vsub.s32 0, %v154
      %v156 = vrot.slane %v151, %v155
      %v158 = vadd.f32 %v147, %v156
      %v159 = vadd.f32 %v148, %v156
      %v160 = vadd.f32 %v149, %v156
      %v161 = vadd.f32 %v150, %v156
      %v162 = vpack.c.bf16 %v159, %v158
      %v163 = vpack.c.bf16 %v161, %v160
      %v166 = vunpack.c.l.b16 %v162
      %v167 = vunpack.c.h.b16 %v162
      %v168 = vunpack.c.l.b16 %v163
      %v169 = vunpack.c.h.b16 %v163
      %v170 = vpack.c.b16 %v166, %v166
      %v171 = vpack.c.b16 %v167, %v167
      %v172 = vpack.c.b16 %v168, %v168
      %v173 = vpack.c.b16 %v169, %v169
      %vm178 = vcmask 781312
      %179 = vst.msk [vmem:[#allocation8] sm:$0xf] %vm178, %v170
      %180 = vst.msk [vmem:[#allocation8 + $0x4] sm:$0xf] %vm178, %v171
      %181 = vst.msk [vmem:[#allocation8 + $0x8] sm:$0xf] %vm178, %v172
      %182 = vst.msk [vmem:[#allocation8 + $0xc] sm:$0xf] %vm178, %v173
    $region29: #{tpu_custom_call.1} parent=1 // pred_fallthru
      _
    // Predicated region
    $region30: #{tpu_custom_call.1} parent=1 // pred_check
      _
    $region31: #{tpu_custom_call.1} parent=1 // pred_check_branch
      %184 = sbr.rel (0) target = $region33
    $region32: #{tpu_custom_call.1} parent=1 // pred_region
      %s186 = ssub.s32 256, 256
      %187 = vsyncadd [#allocation5], %s186
      %s188 = sshll.u32 [#allocation8], 4
      %s189 = int_to_ptr.vmem [resolvable:$true] %s188
      %194 = dma.vmem_to_hbm [thread:$0]  %s189, 256, %s3, [#allocation5], 64, 64, 4
    $region33: #{tpu_custom_call.1} parent=1 // pred_fallthru
      _
    // Predicated region
    $region34: #{tpu_custom_call.1} parent=1 // pred_check
      _
    $region35: #{tpu_custom_call.1} parent=1 // pred_check_branch
      %196 = sbr.rel (0) target = $region37
    $region36: #{tpu_custom_call.1} parent=1 // pred_region
      %197 = dma.done [#allocation5], 256
    $region37: #{tpu_custom_call.1} parent=1 // pred_fallthru
      _
    %198 = vsyncpa [#allocation4], 1
    %199 = vsyncpa [#allocation7], 1
    %200 = vsyncpa [#allocation5], 1

</llo_original>
